<compile_context>
chip_gen: v7x
topology: tpu7x:2x2x1
jax: 0.10.0
libtpu: 0.0.40
codegen_flags: <defaults>
</compile_context>

<pallas_src>
import functools

import jax
import jax.numpy as jnp
from jax.experimental import pallas as pl
from jax.experimental.pallas import tpu as pltpu  # noqa: F401  (imported per convention)

EPS = 1e-5


def _round_up(x, m):
    return (x + m - 1) // m * m


def _projection_head_kernel(x_ref, w1_ref, gamma_ref, beta_ref, w2_ref, o_ref, *, inv_n):
    # x: (Np, Hp) [mxu dtype]; w1: (Hp, Hp); w2: (Hp, Dp); gamma/beta: (1, Hp) f32; o: (Np, Dp) f32.
    # linear1 (bias elided: exactly cancelled by train-mode BN).  f32 accumulation on the MXU.
    h = jnp.dot(x_ref[...], w1_ref[...], preferred_element_type=jnp.float32)

    # BatchNorm1d, training mode: biased batch statistics over axis 0.
    # Zero-padded batch rows contribute 0 to both sums (their x rows are 0 and there is no bias),
    # so dividing by the true batch size gives exact statistics.
    s1 = jnp.sum(h, axis=0, keepdims=True)        # (1, Hp)
    s2 = jnp.sum(h * h, axis=0, keepdims=True)    # (1, Hp)
    mean = s1 * inv_n
    var = s2 * inv_n - mean * mean                # biased variance == PyTorch BN train mode

    # Fused BN affine + ReLU: a single multiply-add pass over (Np, Hp), then max.
    scale = gamma_ref[...] * jax.lax.rsqrt(var + EPS)   # rsqrt -> EUP slot (effectively free)
    shift = beta_ref[...] - mean * scale
    h_act = jnp.maximum(h * scale + shift, 0.0)

    # linear2 (no bias); cast back to the MXU input dtype for the second matmul.
    o_ref[...] = jnp.dot(h_act.astype(w2_ref.dtype), w2_ref[...],
                         preferred_element_type=jnp.float32)


def projection_head(x, w1, b1, gamma, beta, w2, *, mxu_dtype=jnp.float32):
    """Forward pass of ProjectionHead with train-mode BatchNorm1d.

    `b1` is accepted for interface parity with the PyTorch module but is unused: training-mode
    BN subtracts the per-feature batch mean, which exactly cancels a per-feature bias.
    """
    del b1
    n, h_dim = x.shape
    d = w2.shape[1]

    n_p = _round_up(n, 8)        # sublane multiple
    h_p = _round_up(h_dim, 128)  # lane multiple -> lane-dense loads/stores, fuller MXU tiles
    d_p = _round_up(d, 128)      # lane-dense output slab (unmasked vst)

    x_p = jnp.pad(x, ((0, n_p - n), (0, h_p - h_dim))).astype(mxu_dtype)
    w1_p = jnp.pad(w1, ((0, h_p - h_dim), (0, h_p - h_dim))).astype(mxu_dtype)
    w2_p = jnp.pad(w2, ((0, h_p - h_dim), (0, d_p - d))).astype(mxu_dtype)
    gamma_p = jnp.pad(gamma.reshape(1, -1).astype(jnp.float32),
                      ((0, 0), (0, h_p - h_dim)), constant_values=1.0)
    beta_p = jnp.pad(beta.reshape(1, -1).astype(jnp.float32),
                     ((0, 0), (0, h_p - h_dim)))

    kernel = functools.partial(_projection_head_kernel, inv_n=1.0 / n)

    out_p = pl.pallas_call(
        kernel,
        out_shape=jax.ShapeDtypeStruct((n_p, d_p), jnp.float32),
        in_specs=[
            pl.BlockSpec((n_p, h_p), lambda: (0, 0)),
            pl.BlockSpec((h_p, h_p), lambda: (0, 0)),
            pl.BlockSpec((1, h_p), lambda: (0, 0)),
            pl.BlockSpec((1, h_p), lambda: (0, 0)),
            pl.BlockSpec((h_p, d_p), lambda: (0, 0)),
        ],
        out_specs=pl.BlockSpec((n_p, d_p), lambda: (0, 0)),
    )(x_p, w1_p, gamma_p, beta_p, w2_p)

    return out_p[:n, :d]


def reference(x, w1, b1, gamma, beta, w2):
    # Pure-JAX reference, *including* the linear1 bias, matching PyTorch train-mode semantics.
    h = x @ w1 + b1
    mean = jnp.mean(h, axis=0, keepdims=True)
    var = jnp.mean((h - mean) ** 2, axis=0, keepdims=True)
    h = gamma * (h - mean) / jnp.sqrt(var + EPS) + beta
    h = jnp.maximum(h, 0.0)
    return h @ w2


if __name__ == "__main__":
    # Module hyperparams: num_last_hidden_units=H, d=D
    N, H, D = 8, 32, 16

    key = jax.random.PRNGKey(0)
    kx, kw1, kb1, kw2 = jax.random.split(key, 4)

    x = jax.random.normal(kx, (N, H), dtype=jnp.float32)

    # Deterministic synthetic parameter init (not a checkpoint load).
    bound1 = 1.0 / (H ** 0.5)
    w1 = jax.random.uniform(kw1, (H, H), minval=-bound1, maxval=bound1, dtype=jnp.float32)
    b1 = jax.random.uniform(kb1, (1, H), minval=-bound1, maxval=bound1, dtype=jnp.float32)
    gamma = jnp.ones((1, H), dtype=jnp.float32)   # BatchNorm1d default affine init
    beta = jnp.zeros((1, H), dtype=jnp.float32)
    w2 = jax.random.uniform(kw2, (H, D), minval=-bound1, maxval=bound1, dtype=jnp.float32)

    ref = reference(x, w1, b1, gamma, beta, w2)

    # Exact-semantics check (f32 MXU inputs).  Reference includes b1, so this also verifies that
    # dropping the bias inside the kernel is a true no-op under train-mode BN.
    out_f32 = jax.block_until_ready(
        projection_head(x, w1, b1, gamma, beta, w2, mxu_dtype=jnp.float32))
    assert out_f32.shape == (N, D)
    assert jnp.allclose(out_f32, ref, atol=1e-4, rtol=1e-4), "f32 kernel mismatch vs reference"

    # bf16 MXU-input path (recommended on v5e/v6e/v7x: full-rate MXU, half the weight DMA bytes;
    # all BN/ReLU math stays f32).  Loose tolerance: bf16 inputs carry ~0.4% rounding.
    out_bf16 = jax.block_until_ready(
        projection_head(x, w1, b1, gamma, beta, w2, mxu_dtype=jnp.bfloat16))
    assert out_bf16.shape == (N, D)
    assert jnp.allclose(out_bf16, ref, atol=1e-1, rtol=1e-1), "bf16 kernel mismatch vs reference"

    print("KERNEL_OK")
</pallas_src>

<mosaic_0001>
module attributes {stable_mosaic.version = 11 : i64} {
  func.func @_projection_head_kernel(%arg0: memref<8x128xf32, #tpu.memory_space<vmem>>, %arg1: memref<128x128xf32, #tpu.memory_space<vmem>>, %arg2: memref<1x128xf32, #tpu.memory_space<vmem>>, %arg3: memref<1x128xf32, #tpu.memory_space<vmem>>, %arg4: memref<128x128xf32, #tpu.memory_space<vmem>>, %arg5: memref<8x128xf32, #tpu.memory_space<vmem>>) attributes {dimension_semantics = [], scalar_prefetch = 0 : i64, scratch_operands = 0 : i64, tpu.core_type = #tpu.core_type<tc>} {
    %c0 = arith.constant 0 : index
    %c0_0 = arith.constant 0 : index
    %0 = vector.load %arg0[%c0, %c0_0] : memref<8x128xf32, #tpu.memory_space<vmem>>, vector<8x128xf32>
    %c0_1 = arith.constant 0 : index
    %c0_2 = arith.constant 0 : index
    %1 = vector.load %arg1[%c0_1, %c0_2] : memref<128x128xf32, #tpu.memory_space<vmem>>, vector<128x128xf32>
    %cst = arith.constant dense<0.000000e+00> : vector<8x128xf32>
    %2 = tpu.matmul %0, %1, %cst {dimension_numbers = #tpu.dot_dimension_numbers<[1], [0], [0], [1], [0, 0, 1, 1], [], []>} : vector<8x128xf32>, vector<128x128xf32>, vector<8x128xf32> -> vector<8x128xf32>
    %cst_3 = arith.constant dense<0.000000e+00> : vector<128xf32>
    %3 = vector.multi_reduction <add>, %2, %cst_3 [0] : vector<8x128xf32> to vector<128xf32>
    %4 = vector.shape_cast %3 : vector<128xf32> to vector<1x128xf32>
    %5 = arith.mulf %2, %2 : vector<8x128xf32>
    %cst_4 = arith.constant dense<0.000000e+00> : vector<128xf32>
    %6 = vector.multi_reduction <add>, %5, %cst_4 [0] : vector<8x128xf32> to vector<128xf32>
    %7 = vector.shape_cast %6 : vector<128xf32> to vector<1x128xf32>
    %cst_5 = arith.constant 1.250000e-01 : f32
    %8 = vector.broadcast %cst_5 : f32 to vector<1x128xf32>
    %9 = arith.mulf %4, %8 : vector<1x128xf32>
    %cst_6 = arith.constant 1.250000e-01 : f32
    %10 = vector.broadcast %cst_6 : f32 to vector<1x128xf32>
    %11 = arith.mulf %7, %10 : vector<1x128xf32>
    %12 = arith.mulf %9, %9 : vector<1x128xf32>
    %13 = arith.subf %11, %12 : vector<1x128xf32>
    %c0_7 = arith.constant 0 : index
    %c0_8 = arith.constant 0 : index
    %14 = vector.load %arg2[%c0_7, %c0_8] : memref<1x128xf32, #tpu.memory_space<vmem>>, vector<1x128xf32>
    %cst_9 = arith.constant 9.99999974E-6 : f32
    %15 = vector.broadcast %cst_9 : f32 to vector<1x128xf32>
    %16 = arith.addf %13, %15 : vector<1x128xf32>
    %17 = math.rsqrt %16 : vector<1x128xf32>
    %18 = arith.mulf %14, %17 : vector<1x128xf32>
    %c0_10 = arith.constant 0 : index
    %c0_11 = arith.constant 0 : index
    %19 = vector.load %arg3[%c0_10, %c0_11] : memref<1x128xf32, #tpu.memory_space<vmem>>, vector<1x128xf32>
    %20 = arith.mulf %9, %18 : vector<1x128xf32>
    %21 = arith.subf %19, %20 : vector<1x128xf32>
    %22 = vector.broadcast %18 : vector<1x128xf32> to vector<8x128xf32>
    %23 = arith.mulf %2, %22 : vector<8x128xf32>
    %24 = vector.broadcast %21 : vector<1x128xf32> to vector<8x128xf32>
    %25 = arith.addf %23, %24 : vector<8x128xf32>
    %cst_12 = arith.constant 0.000000e+00 : f32
    %26 = vector.broadcast %cst_12 : f32 to vector<8x128xf32>
    %27 = arith.maximumf %25, %26 : vector<8x128xf32>
    %c0_13 = arith.constant 0 : index
    %c0_14 = arith.constant 0 : index
    %28 = vector.load %arg4[%c0_13, %c0_14] : memref<128x128xf32, #tpu.memory_space<vmem>>, vector<128x128xf32>
    %cst_15 = arith.constant dense<0.000000e+00> : vector<8x128xf32>
    %29 = tpu.matmul %27, %28, %cst_15 {dimension_numbers = #tpu.dot_dimension_numbers<[1], [0], [0], [1], [0, 0, 1, 1], [], []>} : vector<8x128xf32>, vector<128x128xf32>, vector<8x128xf32> -> vector<8x128xf32>
    %c0_16 = arith.constant 0 : index
    %c0_17 = arith.constant 0 : index
    %30 = vector.load %arg5[%c0_16, %c0_17] : memref<8x128xf32, #tpu.memory_space<vmem>>, vector<8x128xf32>
    tpu.vector_store %arg5[%c0_16, %c0_17], %29 {strides = array<i32>} : memref<8x128xf32, #tpu.memory_space<vmem>>, vector<8x128xf32>,
    return
  }
}

</mosaic_0001>

<llo_original>
// kernel: tpu_custom_call.1
$region0: #{tpu_custom_call.1}
  #allocation0 [shape = 'u32[]', space=smem, size = 0x4, offset = 0x4, fixed_abs, tag = 'smem constant byte address 0x4 - core index']
  #allocation1 [shape = 'u32[144,128]{1,0:T(1,128)}', space=vmem, size = 0x12000, scoped, tag = 'internal scratch']
  %s0 = inlined_call_operand.hbm [shape: f32[8,128], index: 0, kind: input, shape index: {}]
  %s1 = inlined_call_operand.hbm [shape: f32[128,128], index: 1, kind: input, shape index: {}]
  %s2 = inlined_call_operand.vmem [shape: f32[1,128], index: 2, kind: input, shape index: {}]
  %s3 = inlined_call_operand.vmem [shape: f32[1,128], index: 3, kind: input, shape index: {}]
  %s4 = inlined_call_operand.hbm [shape: f32[128,128], index: 4, kind: input, shape index: {}]
  %s5 = inlined_call_operand.hbm [shape: f32[8,128], index: 5, kind: output, shape index: {}]
  %s6 = sld [smem:[#allocation0]]
  $region42: #{tpu_custom_call.1} parent=0
    _
  %s8 = ssub.s32 1, %s6
  %s9 = scalar_select 0, %s8, %s6
  $region1: #{tpu_custom_call.1} parent=0
    #allocation2 [shape = 'u8[4096]{0}', space=vmem, size = 0x1000, scoped, tag = 'input window, operand 0, single buffered']
    #allocation3 [shape = 's32[1]{0}', space=sflag, size = 0x4, scoped, tag = 'scoped memory for tpu_custom_call.1']
    #allocation4 [shape = 's32[1]{0}', space=sflag, size = 0x4, scoped, tag = 'scoped memory for tpu_custom_call.1']
    #allocation5 [shape = 'u8[65536]{0}', space=vmem, size = 0x10000, scoped, tag = 'input window, operand 1, single buffered']
    #allocation6 [shape = 's32[1]{0}', space=sflag, size = 0x4, scoped, tag = 'scoped memory for tpu_custom_call.1']
    #allocation7 [shape = 'u8[65536]{0}', space=vmem, size = 0x10000, scoped, tag = 'input window, operand 4, single buffered']
    #allocation8 [shape = 'u8[4096]{0}', space=vmem, size = 0x1000, scoped, tag = 'output window, operand 0, single buffered']
    %10 = vsyncpa [#allocation3], 0
    %11 = vsyncpa [#allocation6], 0
    %12 = vsyncpa [#allocation4], 0
    // Predicated region
    $region2: #{tpu_custom_call.1} parent=1 // pred_check
      _
    $region3: #{tpu_custom_call.1} parent=1 // pred_check_branch
      %14 = sbr.rel (0) target = $region5
    $region4: #{tpu_custom_call.1} parent=1 // pred_region
      %s16 = ssub.s32 128, 128
      %17 = vsyncadd [#allocation3], %s16
      %s19 = sshll.u32 [#allocation2], 4
      %s20 = int_to_ptr.vmem [resolvable:$true] %s19
      %22 = dma.hbm_to_vmem [thread:$0]  %s0, 128, %s20, [#allocation3]
    $region5: #{tpu_custom_call.1} parent=1 // pred_fallthru
      _
    // Predicated region
    $region6: #{tpu_custom_call.1} parent=1 // pred_check
      _
    $region7: #{tpu_custom_call.1} parent=1 // pred_check_branch
      %24 = sbr.rel (0) target = $region9
    $region8: #{tpu_custom_call.1} parent=1 // pred_region
      %s26 = ssub.s32 2048, 2048
      %27 = vsyncadd [#allocation6], %s26
      %s28 = sshll.u32 [#allocation5], 4
      %s29 = int_to_ptr.vmem [resolvable:$true] %s28
      %34 = dma.hbm_to_vmem [thread:$0]  %s1, 2048, %s29, [#allocation6], 128, 128, 8
    $region9: #{tpu_custom_call.1} parent=1 // pred_fallthru
      _
    // Predicated region
    $region10: #{tpu_custom_call.1} parent=1 // pred_check
      _
    $region11: #{tpu_custom_call.1} parent=1 // pred_check_branch
      %36 = sbr.rel (0) target = $region13
    $region12: #{tpu_custom_call.1} parent=1 // pred_region
      _
    $region13: #{tpu_custom_call.1} parent=1 // pred_fallthru
      _
    // Predicated region
    $region14: #{tpu_custom_call.1} parent=1 // pred_check
      _
    $region15: #{tpu_custom_call.1} parent=1 // pred_check_branch
      %38 = sbr.rel (0) target = $region17
    $region16: #{tpu_custom_call.1} parent=1 // pred_region
      _
    $region17: #{tpu_custom_call.1} parent=1 // pred_fallthru
      _
    // Predicated region
    $region18: #{tpu_custom_call.1} parent=1 // pred_check
      _
    $region19: #{tpu_custom_call.1} parent=1 // pred_check_branch
      %40 = sbr.rel (0) target = $region21
    $region20: #{tpu_custom_call.1} parent=1 // pred_region
      %s42 = ssub.s32 2048, 2048
      %43 = vsyncadd [#allocation6], %s42
      %s44 = sshll.u32 [#allocation7], 4
      %s45 = int_to_ptr.vmem [resolvable:$true] %s44
      %50 = dma.hbm_to_vmem [thread:$0]  %s4, 2048, %s45, [#allocation6], 128, 128, 8
    $region21: #{tpu_custom_call.1} parent=1 // pred_fallthru
      _
    // Predicated region
    $region22: #{tpu_custom_call.1} parent=1 // pred_check
      _
    $region23: #{tpu_custom_call.1} parent=1 // pred_check_branch
      %52 = sbr.rel (0) target = $region25
    $region24: #{tpu_custom_call.1} parent=1 // pred_region
      %53 = dma.done [#allocation3], 128
    $region25: #{tpu_custom_call.1} parent=1 // pred_fallthru
      _
    // Predicated region
    $region26: #{tpu_custom_call.1} parent=1 // pred_check
      _
    $region27: #{tpu_custom_call.1} parent=1 // pred_check_branch
      %55 = sbr.rel (0) target = $region29
    $region28: #{tpu_custom_call.1} parent=1 // pred_region
      %56 = dma.done [#allocation6], 2048
    $region29: #{tpu_custom_call.1} parent=1 // pred_fallthru
      _
    // Predicated region
    $region30: #{tpu_custom_call.1} parent=1 // pred_check
      _
    $region31: #{tpu_custom_call.1} parent=1 // pred_check_branch
      %58 = sbr.rel (0) target = $region33
    $region32: #{tpu_custom_call.1} parent=1 // pred_region
      %59 = dma.done [#allocation6], 2048
    $region33: #{tpu_custom_call.1} parent=1 // pred_fallthru
      _
    %v60 = vld [vmem:[#allocation2] sm:$0xff]
    %v61 = vld [vmem:[#allocation5] sm:$0xff]
    %v62 = vld [vmem:[#allocation5 + $0x8] sm:$0xff]
    %v63 = vld [vmem:[#allocation5 + $0x10] sm:$0xff]
    %v64 = vld [vmem:[#allocation5 + $0x18] sm:$0xff]
    %v65 = vld [vmem:[#allocation5 + $0x20] sm:$0xff]
    %v66 = vld [vmem:[#allocation5 + $0x28] sm:$0xff]
    %v67 = vld [vmem:[#allocation5 + $0x30] sm:$0xff]
    %v68 = vld [vmem:[#allocation5 + $0x38] sm:$0xff]
    %v69 = vld [vmem:[#allocation5 + $0x40] sm:$0xff]
    %v70 = vld [vmem:[#allocation5 + $0x48] sm:$0xff]
    %v71 = vld [vmem:[#allocation5 + $0x50] sm:$0xff]
    %v72 = vld [vmem:[#allocation5 + $0x58] sm:$0xff]
    %v73 = vld [vmem:[#allocation5 + $0x60] sm:$0xff]
    %v74 = vld [vmem:[#allocation5 + $0x68] sm:$0xff]
    %v75 = vld [vmem:[#allocation5 + $0x70] sm:$0xff]
    %v76 = vld [vmem:[#allocation5 + $0x78] sm:$0xff]
    %77 = vmatprep.subr.mxu0 0.0
    %78 = vmatpush1.msra.mxu0 %v61
    %79 = vmatprep.subr.mxu0 0.0
    %80 = vmatpush1.msra.mxu0 %v62
    %81 = vmatprep.subr.mxu0 0.0
    %82 = vmatpush1.msra.mxu0 %v63
    %83 = vmatprep.subr.mxu0 0.0
    %84 = vmatpush1.msra.mxu0 %v64
    %85 = vmatprep.subr.mxu0 0.0
    %86 = vmatpush1.msra.mxu0 %v65
    %87 = vmatprep.subr.mxu0 0.0
    %88 = vmatpush1.msra.mxu0 %v66
    %89 = vmatprep.subr.mxu0 0.0
    %90 = vmatpush1.msra.mxu0 %v67
    %91 = vmatprep.subr.mxu0 0.0
    %92 = vmatpush1.msra.mxu0 %v68
    %93 = vmatprep.subr.mxu0 0.0
    %94 = vmatpush1.msra.mxu0 %v69
    %95 = vmatprep.subr.mxu0 0.0
    %96 = vmatpush1.msra.mxu0 %v70
    %97 = vmatprep.subr.mxu0 0.0
    %98 = vmatpush1.msra.mxu0 %v71
    %99 = vmatprep.subr.mxu0 0.0
    %100 = vmatpush1.msra.mxu0 %v72
    %101 = vmatprep.subr.mxu0 0.0
    %102 = vmatpush1.msra.mxu0 %v73
    %103 = vmatprep.subr.mxu0 0.0
    %104 = vmatpush1.msra.mxu0 %v74
    %105 = vmatprep.subr.mxu0 0.0
    %106 = vmatpush1.msra.mxu0 %v75
    %107 = vmatprep.subr.mxu0 0.0
    %108 = vmatpush1.msra.mxu0 %v76
    %109 = vmatprep.subr.mxu0 0.0
    %110 = vmatpush1.msra.mxu0 0.0
    %111 = vmatprep.subr.mxu0 0.0
    %112 = vmatpush1.msra.mxu0 0.0
    %113 = vmatprep.subr.mxu0 0.0
    %114 = vmatpush1.msra.mxu0 0.0
    %115 = vmatprep.subr.mxu0 0.0
    %116 = vmatpush1.msra.mxu0 0.0
    %117 = vmatprep.subr.mxu0 0.0
    %118 = vmatpush1.msra.mxu0 0.0
    %119 = vmatprep.subr.mxu0 0.0
    %120 = vmatpush1.msra.mxu0 0.0
    %121 = vmatprep.subr.mxu0 0.0
    %122 = vmatpush1.msra.mxu0 0.0
    %123 = vmatprep.subr.mxu0 0.0
    %124 = vmatpush1.msra.mxu0 0.0
    %125 = vmatprep.subr.mxu0 0.0
    %126 = vmatpush1.msra.mxu0 0.0
    %127 = vmatprep.subr.mxu0 0.0
    %128 = vmatpush1.msra.mxu0 0.0
    %129 = vmatprep.subr.mxu0 0.0
    %130 = vmatpush1.msra.mxu0 0.0
    %131 = vmatprep.subr.mxu0 0.0
    %132 = vmatpush1.msra.mxu0 0.0
    %133 = vmatprep.subr.mxu0 0.0
    %134 = vmatpush1.msra.mxu0 0.0
    %135 = vmatprep.subr.mxu0 0.0
    %136 = vmatpush1.msra.mxu0 0.0
    %137 = vmatprep.subr.mxu0 0.0
    %138 = vmatpush1.msra.mxu0 0.0
    %139 = vmatprep.subr.mxu0 0.0
    %140 = vmatpush1.msra.mxu0 0.0
    %141 = vmatprep.mubr.f32.mxu0 0.0
    %142 = vmatmul.mubr.f32.gmra.mrb[0].mxu0 %v60
    %v143 = vpop.f32.mrb[0].mxu0
    %v144 = vadd.f32 0.0, %v143
    %v145 = vpop.f32.mrb[0].mxu0
    %146 = vdwg.mxu0
    %v147 = vrot.slane %v144, 4
    %v148 = vadd.f32 %v144, %v147
    %v149 = vrot.slane %v148, 2
    %v150 = vadd.f32 %v148, %v149
    %v151 = vrot.slane %v150, 1
    %v152 = vadd.f32 %v150, %v151
    %v153 = vmul.f32 %v144, %v144
    %v154 = vrot.slane %v153, 4
    %v155 = vadd.f32 %v153, %v154
    %v156 = vrot.slane %v155, 2
    %v157 = vadd.f32 %v155, %v156
    %v158 = vrot.slane %v157, 1
    %v159 = vadd.f32 %v157, %v158
    %v160 = vmul.f32 %v152, 0.125
    %v161 = vmul.f32 %v159, 0.125
    %v162 = vmul.f32 %v160, %v160
    %v163 = vsub.f32 %v161, %v162
    %v164 = vld [vmem:[%s2] sm:$0x1]
    %v165 = vadd.f32 %v163, 1e-05
    %v166 = vrsqrt.pop %v165
    %v167 = vmul.f32 %v164, %v166
    %v168 = vld [vmem:[%s3] sm:$0x1]
    %v169 = vmul.f32 %v160, %v167
    %v170 = vsub.f32 %v168, %v169
    %v172 = vlaneseq
    %v173 = vshrl.u32 %v172, 7
    %v174 = vsub.s32 0, %v173
    %v175 = vrot.slane %v167, %v174
    %v177 = vmul.f32 %v144, %v175
    %v179 = vlaneseq
    %v180 = vshrl.u32 %v179, 7
    %v181 = vsub.s32 0, %v180
    %v182 = vrot.slane %v170, %v181
    %v184 = vadd.f32 %v177, %v182
    %v185 = vmax.f32 %v184, 0.0
    %v186 = vld [vmem:[#allocation7] sm:$0xff]
    %v187 = vld [vmem:[#allocation7 + $0x8] sm:$0xff]
    %v188 = vld [vmem:[#allocation7 + $0x10] sm:$0xff]
    %v189 = vld [vmem:[#allocation7 + $0x18] sm:$0xff]
    %v190 = vld [vmem:[#allocation7 + $0x20] sm:$0xff]
    %v191 = vld [vmem:[#allocation7 + $0x28] sm:$0xff]
    %v192 = vld [vmem:[#allocation7 + $0x30] sm:$0xff]
    %v193 = vld [vmem:[#allocation7 + $0x38] sm:$0xff]
    %v194 = vld [vmem:[#allocation7 + $0x40] sm:$0xff]
    %v195 = vld [vmem:[#allocation7 + $0x48] sm:$0xff]
    %v196 = vld [vmem:[#allocation7 + $0x50] sm:$0xff]
    %v197 = vld [vmem:[#allocation7 + $0x58] sm:$0xff]
    %v198 = vld [vmem:[#allocation7 + $0x60] sm:$0xff]
    %v199 = vld [vmem:[#allocation7 + $0x68] sm:$0xff]
    %v200 = vld [vmem:[#allocation7 + $0x70] sm:$0xff]
    %v201 = vld [vmem:[#allocation7 + $0x78] sm:$0xff]
    %202 = vmatprep.subr.mxu0 0.0
    %203 = vmatpush1.msra.mxu0 %v186
    %204 = vmatprep.subr.mxu0 0.0
    %205 = vmatpush1.msra.mxu0 %v187
    %206 = vmatprep.subr.mxu0 0.0
    %207 = vmatpush1.msra.mxu0 %v188
    %208 = vmatprep.subr.mxu0 0.0
    %209 = vmatpush1.msra.mxu0 %v189
    %210 = vmatprep.subr.mxu0 0.0
    %211 = vmatpush1.msra.mxu0 %v190
    %212 = vmatprep.subr.mxu0 0.0
    %213 = vmatpush1.msra.mxu0 %v191
    %214 = vmatprep.subr.mxu0 0.0
    %215 = vmatpush1.msra.mxu0 %v192
    %216 = vmatprep.subr.mxu0 0.0
    %217 = vmatpush1.msra.mxu0 %v193
    %218 = vmatprep.subr.mxu0 0.0
    %219 = vmatpush1.msra.mxu0 %v194
    %220 = vmatprep.subr.mxu0 0.0
    %221 = vmatpush1.msra.mxu0 %v195
    %222 = vmatprep.subr.mxu0 0.0
    %223 = vmatpush1.msra.mxu0 %v196
    %224 = vmatprep.subr.mxu0 0.0
    %225 = vmatpush1.msra.mxu0 %v197
    %226 = vmatprep.subr.mxu0 0.0
    %227 = vmatpush1.msra.mxu0 %v198
    %228 = vmatprep.subr.mxu0 0.0
    %229 = vmatpush1.msra.mxu0 %v199
    %230 = vmatprep.subr.mxu0 0.0
    %231 = vmatpush1.msra.mxu0 %v200
    %232 = vmatprep.subr.mxu0 0.0
    %233 = vmatpush1.msra.mxu0 %v201
    %234 = vmatprep.subr.mxu0 0.0
    %235 = vmatpush1.msra.mxu0 0.0
    %236 = vmatprep.subr.mxu0 0.0
    %237 = vmatpush1.msra.mxu0 0.0
    %238 = vmatprep.subr.mxu0 0.0
    %239 = vmatpush1.msra.mxu0 0.0
    %240 = vmatprep.subr.mxu0 0.0
    %241 = vmatpush1.msra.mxu0 0.0
    %242 = vmatprep.subr.mxu0 0.0
    %243 = vmatpush1.msra.mxu0 0.0
    %244 = vmatprep.subr.mxu0 0.0
    %245 = vmatpush1.msra.mxu0 0.0
    %246 = vmatprep.subr.mxu0 0.0
    %247 = vmatpush1.msra.mxu0 0.0
    %248 = vmatprep.subr.mxu0 0.0
    %249 = vmatpush1.msra.mxu0 0.0
    %250 = vmatprep.subr.mxu0 0.0
    %251 = vmatpush1.msra.mxu0 0.0
    %252 = vmatprep.subr.mxu0 0.0
    %253 = vmatpush1.msra.mxu0 0.0
    %254 = vmatprep.subr.mxu0 0.0
    %255 = vmatpush1.msra.mxu0 0.0
    %256 = vmatprep.subr.mxu0 0.0
    %257 = vmatpush1.msra.mxu0 0.0
    %258 = vmatprep.subr.mxu0 0.0
    %259 = vmatpush1.msra.mxu0 0.0
    %260 = vmatprep.subr.mxu0 0.0
    %261 = vmatpush1.msra.mxu0 0.0
    %262 = vmatprep.subr.mxu0 0.0
    %263 = vmatpush1.msra.mxu0 0.0
    %264 = vmatprep.subr.mxu0 0.0
    %265 = vmatpush1.msra.mxu0 0.0
    %266 = vmatprep.mubr.f32.mxu0 0.0
    %267 = vmatmul.mubr.f32.gmra.mrb[0].mxu0 %v185
    %v268 = vpop.f32.mrb[0].mxu0
    %v269 = vadd.f32 0.0, %v268
    %v270 = vpop.f32.mrb[0].mxu0
    %271 = vdwg.mxu0
    %272 = vst [vmem:[#allocation8] sm:$0xff] %v269
    // Predicated region
    $region34: #{tpu_custom_call.1} parent=1 // pred_check
      _
    $region35: #{tpu_custom_call.1} parent=1 // pred_check_branch
      %274 = sbr.rel (0) target = $region37
    $region36: #{tpu_custom_call.1} parent=1 // pred_region
      %s276 = ssub.s32 128, 128
      %277 = vsyncadd [#allocation4], %s276
      %s279 = sshll.u32 [#allocation8], 4
      %s280 = int_to_ptr.vmem [resolvable:$true] %s279
      %282 = dma.vmem_to_hbm [thread:$0]  %s280, 128, %s5, [#allocation4]
    $region37: #{tpu_custom_call.1} parent=1 // pred_fallthru
      _
    // Predicated region
    $region38: #{tpu_custom_call.1} parent=1 // pred_check
      _
    $region39: #{tpu_custom_call.1} parent=1 // pred_check_branch
      %284 = sbr.rel (0) target = $region41
    $region40: #{tpu_custom_call.1} parent=1 // pred_region
      %285 = dma.done [#allocation4], 128
    $region41: #{tpu_custom_call.1} parent=1 // pred_fallthru
      _
    %286 = vsyncpa [#allocation3], 1
    %287 = vsyncpa [#allocation6], 1
    %288 = vsyncpa [#allocation4], 1

</llo_original>
